<compile_context>
chip_gen: v7x
topology: tpu7x:2x2x1
jax: 0.10.0
libtpu: 0.0.40
codegen_flags: <defaults>
</compile_context>

<pallas_src>
import functools

import numpy as np
import jax
import jax.numpy as jnp
from jax.experimental import pallas as pl
from jax.experimental.pallas import tpu as pltpu


# ----------------------------------------------------------------------------- kernel

def _make_resblock_kernel(Lout, Cin, Cout, has_sc_conv):
    """Fused relu(bn2(conv2(relu(bn1(conv1(x))))) + shortcut(x)) for one batch element."""

    def kernel(*refs):
        if has_sc_conv:
            (a1_ref, w1_ref, s1_ref, w2_ref, s2_ref,
             wsc_ref, ssc_ref, o_ref, out1_pad) = refs
        else:
            (a1_ref, w1_ref, s1_ref, w2_ref, s2_ref,
             o_ref, out1_pad) = refs

        a1 = a1_ref[0]                                        # (Lout, 3*Cin) bf16

        # ---- conv1 + bn1 + relu (BN scale folded into w1, conv bias/beta into s1)
        h = jnp.dot(a1, w1_ref[...], preferred_element_type=jnp.float32)
        h = jnp.maximum(h + s1_ref[...], 0.0)                 # (Lout, Cout) f32

        # ---- shortcut: its 1x1 stride-s input is exactly conv1's centre tap
        x_center = a1[:, Cin:2 * Cin]                         # (Lout, Cin) bf16
        if has_sc_conv:
            sc = jnp.dot(x_center, wsc_ref[...],
                         preferred_element_type=jnp.float32) + ssc_ref[...]
        else:
            sc = x_center.astype(jnp.float32)                 # identity (Cin == Cout)

        # ---- zero-pad out1 along L inside VMEM for conv2 (kernel=3, pad=1)
        out1_pad[...] = jnp.zeros_like(out1_pad)
        out1_pad[1:Lout + 1, :] = h

        # ---- conv2 + bn2 via 3-tap accumulation, + residual, + final relu
        acc = sc + s2_ref[...]
        for t in range(3):                                    # static, unrolled
            acc = acc + jnp.dot(out1_pad[t:t + Lout, :].astype(jnp.bfloat16),
                                w2_ref[t * Cout:(t + 1) * Cout, :],
                                preferred_element_type=jnp.float32)
        o_ref[0] = jnp.maximum(acc, 0.0).astype(o_ref.dtype)

    return kernel


def resblock_pallas(a1, params, *, Lout, Cin, Cout, out_dtype=jnp.float32):
    """a1: (B, Lout, 3*Cin) bf16 tap-major im2col of x -> (B, Lout, Cout)."""
    B = a1.shape[0]
    has_sc = "wsc" in params

    args = [a1, params["w1"], params["s1"], params["w2"], params["s2"]]
    in_specs = [
        pl.BlockSpec((1, Lout, 3 * Cin), lambda b: (b, 0, 0)),
        pl.BlockSpec((3 * Cin, Cout), lambda b: (0, 0)),
        pl.BlockSpec((1, Cout), lambda b: (0, 0)),
        pl.BlockSpec((3 * Cout, Cout), lambda b: (0, 0)),
        pl.BlockSpec((1, Cout), lambda b: (0, 0)),
    ]
    if has_sc:
        args += [params["wsc"], params["ssc"]]
        in_specs += [
            pl.BlockSpec((Cin, Cout), lambda b: (0, 0)),
            pl.BlockSpec((1, Cout), lambda b: (0, 0)),
        ]

    return pl.pallas_call(
        _make_resblock_kernel(Lout, Cin, Cout, has_sc),
        out_shape=jax.ShapeDtypeStruct((B, Lout, Cout), out_dtype),
        grid=(B,),
        in_specs=in_specs,
        out_specs=pl.BlockSpec((1, Lout, Cout), lambda b: (b, 0, 0)),
        scratch_shapes=[pltpu.VMEM((Lout + 2, Cout), jnp.float32)],  # padded out1
        compiler_params=pltpu.CompilerParams(
            dimension_semantics=("parallel",),        # >=2 blocks -> v7x megacore works
            vmem_limit_bytes=16 * 1024 * 1024,
        ),
    )(*args)


# --------------------------------------------------------------------------- glue (JAX)

def _out_len(L, k, stride, pad):
    return (L + 2 * pad - k) // stride + 1


def im2col_1d(x, ksize, stride, pad):
    """x: (B, L, C) channel-last -> (B, Lout, ksize*C), tap-major (thin XLA glue)."""
    B, L, C = x.shape
    Lout = _out_len(L, ksize, stride, pad)
    xp = jnp.pad(x, ((0, 0), (pad, pad), (0, 0)))
    cols = [xp[:, t:t + stride * (Lout - 1) + 1:stride, :] for t in range(ksize)]
    return jnp.concatenate(cols, axis=-1), Lout


def resblock_forward(x_ncl, params, stride, out_dtype=jnp.float32):
    """x_ncl: (B, Cin, L) channel-first like PyTorch -> (B, Cout, Lout)."""
    B, Cin, L = x_ncl.shape
    Cout = params["w1"].shape[1]
    # Channel-last internally so Cout rides the 128 lanes.
    # TODO(synk): when stacking ResBlocks, keep (B, L, C) bf16 end-to-end and only
    #             transpose at model boundaries.
    x = jnp.transpose(x_ncl, (0, 2, 1)).astype(jnp.bfloat16)
    a1, Lout = im2col_1d(x, 3, stride, 1)
    out = resblock_pallas(a1, params, Lout=Lout, Cin=Cin, Cout=Cout, out_dtype=out_dtype)
    return jnp.transpose(out, (0, 2, 1))


# ------------------------------------------------------------------------ params (init)

def init_conv_bn_params(key, cin, cout, ksize):
    """Conv1d + eval-mode BatchNorm1d, BN scale folded into bf16 weights once at init."""
    kw, kb, kg, kbt = jax.random.split(key, 4)
    w = jax.random.normal(kw, (ksize, cin, cout), jnp.float32) / np.sqrt(ksize * cin)
    b = 0.05 * jax.random.normal(kb, (cout,), jnp.float32)
    gamma = 1.0 + 0.1 * jax.random.normal(kg, (cout,), jnp.float32)
    beta = 0.1 * jax.random.normal(kbt, (cout,), jnp.float32)
    running_mean = jnp.zeros((cout,), jnp.float32)
    running_var = jnp.ones((cout,), jnp.float32)
    eps = 1e-5
    scale = gamma / jnp.sqrt(running_var + eps)
    # (A@W)*s == A@(W*s); conv bias / running mean / beta fold into the additive shift.
    w_folded = (w * scale[None, None, :]).reshape(ksize * cin, cout).astype(jnp.bfloat16)
    shift = (beta + scale * (b - running_mean)).reshape(1, cout).astype(jnp.float32)
    return w_folded, shift


def init_resblock(key, cin, cout, stride):
    k1, k2, k3 = jax.random.split(key, 3)
    w1, s1 = init_conv_bn_params(k1, cin, cout, 3)
    w2, s2 = init_conv_bn_params(k2, cout, cout, 3)
    p = {"w1": w1, "s1": s1, "w2": w2, "s2": s2}
    if stride != 1 or cin != cout:
        p["wsc"], p["ssc"] = init_conv_bn_params(k3, cin, cout, 1)
    return p


# ------------------------------------------------------------------- pure-JAX reference

def resblock_ref(x_ncl, params, stride):
    """Pure-JAX reference mirroring the kernel's bf16 MXU-operand rounding."""
    Cin = x_ncl.shape[1]
    Cout = params["w1"].shape[1]
    x = jnp.transpose(x_ncl, (0, 2, 1)).astype(jnp.bfloat16)
    a1, Lout = im2col_1d(x, 3, stride, 1)
    a1 = a1.astype(jnp.float32)
    w1 = params["w1"].astype(jnp.float32)
    h = jnp.maximum(jnp.einsum("blk,kn->bln", a1, w1) + params["s1"][None], 0.0)

    xc = a1[:, :, Cin:2 * Cin]
    if "wsc" in params:
        sc = jnp.einsum("blk,kn->bln", xc, params["wsc"].astype(jnp.float32)) + params["ssc"][None]
    else:
        sc = xc

    hb = h.astype(jnp.bfloat16).astype(jnp.float32)
    hp = jnp.pad(hb, ((0, 0), (1, 1), (0, 0)))
    w2 = params["w2"].astype(jnp.float32)
    acc = sc + params["s2"][None]
    for t in range(3):
        acc = acc + jnp.einsum("blk,kn->bln", hp[:, t:t + Lout, :],
                               w2[t * Cout:(t + 1) * Cout, :])
    out = jnp.maximum(acc, 0.0)
    return jnp.transpose(out, (0, 2, 1))


# ------------------------------------------------------------------------------- main

if __name__ == "__main__":
    key = jax.random.PRNGKey(0)
    kx1, kp1, kx2, kp2 = jax.random.split(key, 4)

    # Case 1: downsampling block (stride=2, 64->128 channels) -> conv-shortcut branch.
    B, Cin, Cout, L, stride = 2, 64, 128, 32, 2
    x1 = jax.random.normal(kx1, (B, Cin, L), jnp.float32)      # PyTorch (B, C, L) layout
    p1 = init_resblock(kp1, Cin, Cout, stride)
    y1 = jax.jit(functools.partial(resblock_forward, stride=stride))(x1, p1)
    jax.block_until_ready(y1)

    Lout = _out_len(L, 3, stride, 1)
    assert y1.shape == (B, Cout, Lout), y1.shape
    assert bool(jnp.all(jnp.isfinite(y1)))
    np.testing.assert_allclose(np.asarray(y1, np.float32),
                               np.asarray(resblock_ref(x1, p1, stride), np.float32),
                               atol=1e-2, rtol=1e-2)

    # Case 2: identity-shortcut block (stride=1, same channels).
    x2 = jax.random.normal(kx2, (B, Cout, L), jnp.float32)
    p2 = init_resblock(kp2, Cout, Cout, 1)
    y2 = jax.jit(functools.partial(resblock_forward, stride=1))(x2, p2)
    jax.block_until_ready(y2)

    assert y2.shape == (B, Cout, L), y2.shape
    np.testing.assert_allclose(np.asarray(y2, np.float32),
                               np.asarray(resblock_ref(x2, p2, 1), np.float32),
                               atol=1e-2, rtol=1e-2)

    print("KERNEL_OK")
</pallas_src>

<mosaic_0001>
module attributes {stable_mosaic.version = 11 : i64} {
  func.func @kernel(%arg0: i32, %arg1: memref<1x16x192xbf16, #tpu.memory_space<vmem>>, %arg2: memref<192x128xbf16, #tpu.memory_space<vmem>>, %arg3: memref<1x128xf32, #tpu.memory_space<vmem>>, %arg4: memref<384x128xbf16, #tpu.memory_space<vmem>>, %arg5: memref<1x128xf32, #tpu.memory_space<vmem>>, %arg6: memref<64x128xbf16, #tpu.memory_space<vmem>>, %arg7: memref<1x128xf32, #tpu.memory_space<vmem>>, %arg8: memref<1x16x128xf32, #tpu.memory_space<vmem>>, %arg9: memref<18x128xf32, #tpu.memory_space<vmem>>) attributes {dimension_semantics = [#tpu.dimension_semantics<parallel>], iteration_bounds = array<i64: 2>, scalar_prefetch = 0 : i64, scratch_operands = 1 : i64, tpu.core_type = #tpu.core_type<tc>, window_params = [{transform_indices = @transform_0, window_bounds = array<i64: 1, 16, 192>}, {pipeline_mode = #tpu.pipeline_mode<synchronous>, transform_indices = @transform_1, window_bounds = array<i64: 192, 128>}, {pipeline_mode = #tpu.pipeline_mode<synchronous>, transform_indices = @transform_2, window_bounds = array<i64: 1, 128>}, {pipeline_mode = #tpu.pipeline_mode<synchronous>, transform_indices = @transform_3, window_bounds = array<i64: 384, 128>}, {pipeline_mode = #tpu.pipeline_mode<synchronous>, transform_indices = @transform_4, window_bounds = array<i64: 1, 128>}, {pipeline_mode = #tpu.pipeline_mode<synchronous>, transform_indices = @transform_5, window_bounds = array<i64: 64, 128>}, {pipeline_mode = #tpu.pipeline_mode<synchronous>, transform_indices = @transform_6, window_bounds = array<i64: 1, 128>}, {transform_indices = @transform_7, window_bounds = array<i64: 1, 16, 128>}]} {
    %c0 = arith.constant 0 : index
    %c0_0 = arith.constant 0 : index
    %c0_1 = arith.constant 0 : index
    %0 = vector.load %arg1[%c0, %c0_0, %c0_1] : memref<1x16x192xbf16, #tpu.memory_space<vmem>>, vector<1x16x192xbf16>
    %1 = vector.shape_cast %0 : vector<1x16x192xbf16> to vector<16x192xbf16>
    %c0_2 = arith.constant 0 : index
    %c0_3 = arith.constant 0 : index
    %2 = vector.load %arg2[%c0_2, %c0_3] : memref<192x128xbf16, #tpu.memory_space<vmem>>, vector<192x128xbf16>
    %cst = arith.constant dense<0.000000e+00> : vector<16x128xf32>
    %3 = tpu.matmul %1, %2, %cst {dimension_numbers = #tpu.dot_dimension_numbers<[1], [0], [0], [1], [0, 0, 1, 1], [], []>} : vector<16x192xbf16>, vector<192x128xbf16>, vector<16x128xf32> -> vector<16x128xf32>
    %c0_4 = arith.constant 0 : index
    %c0_5 = arith.constant 0 : index
    %4 = vector.load %arg3[%c0_4, %c0_5] : memref<1x128xf32, #tpu.memory_space<vmem>>, vector<1x128xf32>
    %5 = vector.broadcast %4 : vector<1x128xf32> to vector<16x128xf32>
    %6 = arith.addf %3, %5 : vector<16x128xf32>
    %cst_6 = arith.constant 0.000000e+00 : f32
    %7 = vector.broadcast %cst_6 : f32 to vector<16x128xf32>
    %8 = arith.maximumf %6, %7 : vector<16x128xf32>
    %9 = vector.extract_strided_slice %1 {offsets = [0, 64], sizes = [16, 64], strides = [1, 1]} : vector<16x192xbf16> to vector<16x64xbf16>
    %c0_7 = arith.constant 0 : index
    %c0_8 = arith.constant 0 : index
    %10 = vector.load %arg6[%c0_7, %c0_8] : memref<64x128xbf16, #tpu.memory_space<vmem>>, vector<64x128xbf16>
    %cst_9 = arith.constant dense<0.000000e+00> : vector<16x128xf32>
    %11 = tpu.matmul %9, %10, %cst_9 {dimension_numbers = #tpu.dot_dimension_numbers<[1], [0], [0], [1], [0, 0, 1, 1], [], []>} : vector<16x64xbf16>, vector<64x128xbf16>, vector<16x128xf32> -> vector<16x128xf32>
    %c0_10 = arith.constant 0 : index
    %c0_11 = arith.constant 0 : index
    %12 = vector.load %arg7[%c0_10, %c0_11] : memref<1x128xf32, #tpu.memory_space<vmem>>, vector<1x128xf32>
    %13 = vector.broadcast %12 : vector<1x128xf32> to vector<16x128xf32>
    %14 = arith.addf %11, %13 : vector<16x128xf32>
    %cst_12 = arith.constant 0.000000e+00 : f32
    %15 = vector.broadcast %cst_12 : f32 to vector<18x128xf32>
    %c0_13 = arith.constant 0 : index
    %c0_14 = arith.constant 0 : index
    %16 = vector.load %arg9[%c0_13, %c0_14] : memref<18x128xf32, #tpu.memory_space<vmem>>, vector<18x128xf32>
    tpu.vector_store %arg9[%c0_13, %c0_14], %15 {strides = array<i32>} : memref<18x128xf32, #tpu.memory_space<vmem>>, vector<18x128xf32>,
    %c1 = arith.constant 1 : index
    %c0_15 = arith.constant 0 : index
    %17 = vector.load %arg9[%c1, %c0_15] : memref<18x128xf32, #tpu.memory_space<vmem>>, vector<16x128xf32>
    tpu.vector_store %arg9[%c1, %c0_15], %8 {strides = array<i32>} : memref<18x128xf32, #tpu.memory_space<vmem>>, vector<16x128xf32>,
    %c0_16 = arith.constant 0 : index
    %c0_17 = arith.constant 0 : index
    %18 = vector.load %arg5[%c0_16, %c0_17] : memref<1x128xf32, #tpu.memory_space<vmem>>, vector<1x128xf32>
    %19 = vector.broadcast %18 : vector<1x128xf32> to vector<16x128xf32>
    %20 = arith.addf %14, %19 : vector<16x128xf32>
    %c0_18 = arith.constant 0 : index
    %c0_19 = arith.constant 0 : index
    %21 = vector.load %arg9[%c0_18, %c0_19] : memref<18x128xf32, #tpu.memory_space<vmem>>, vector<16x128xf32>
    %22 = arith.truncf %21 : vector<16x128xf32> to vector<16x128xbf16>
    %c0_20 = arith.constant 0 : index
    %c0_21 = arith.constant 0 : index
    %23 = vector.load %arg4[%c0_20, %c0_21] : memref<384x128xbf16, #tpu.memory_space<vmem>>, vector<128x128xbf16>
    %cst_22 = arith.constant dense<0.000000e+00> : vector<16x128xf32>
    %24 = tpu.matmul %22, %23, %cst_22 {dimension_numbers = #tpu.dot_dimension_numbers<[1], [0], [0], [1], [0, 0, 1, 1], [], []>} : vector<16x128xbf16>, vector<128x128xbf16>, vector<16x128xf32> -> vector<16x128xf32>
    %25 = arith.addf %20, %24 : vector<16x128xf32>
    %c1_23 = arith.constant 1 : index
    %c0_24 = arith.constant 0 : index
    %26 = vector.load %arg9[%c1_23, %c0_24] : memref<18x128xf32, #tpu.memory_space<vmem>>, vector<16x128xf32>
    %27 = arith.truncf %26 : vector<16x128xf32> to vector<16x128xbf16>
    %c128 = arith.constant 128 : index
    %c0_25 = arith.constant 0 : index
    %28 = vector.load %arg4[%c128, %c0_25] : memref<384x128xbf16, #tpu.memory_space<vmem>>, vector<128x128xbf16>
    %cst_26 = arith.constant dense<0.000000e+00> : vector<16x128xf32>
    %29 = tpu.matmul %27, %28, %cst_26 {dimension_numbers = #tpu.dot_dimension_numbers<[1], [0], [0], [1], [0, 0, 1, 1], [], []>} : vector<16x128xbf16>, vector<128x128xbf16>, vector<16x128xf32> -> vector<16x128xf32>
    %30 = arith.addf %25, %29 : vector<16x128xf32>
    %c2 = arith.constant 2 : index
    %c0_27 = arith.constant 0 : index
    %31 = vector.load %arg9[%c2, %c0_27] : memref<18x128xf32, #tpu.memory_space<vmem>>, vector<16x128xf32>
    %32 = arith.truncf %31 : vector<16x128xf32> to vector<16x128xbf16>
    %c256 = arith.constant 256 : index
    %c0_28 = arith.constant 0 : index
    %33 = vector.load %arg4[%c256, %c0_28] : memref<384x128xbf16, #tpu.memory_space<vmem>>, vector<128x128xbf16>
    %cst_29 = arith.constant dense<0.000000e+00> : vector<16x128xf32>
    %34 = tpu.matmul %32, %33, %cst_29 {dimension_numbers = #tpu.dot_dimension_numbers<[1], [0], [0], [1], [0, 0, 1, 1], [], []>} : vector<16x128xbf16>, vector<128x128xbf16>, vector<16x128xf32> -> vector<16x128xf32>
    %35 = arith.addf %30, %34 : vector<16x128xf32>
    %cst_30 = arith.constant 0.000000e+00 : f32
    %36 = vector.broadcast %cst_30 : f32 to vector<16x128xf32>
    %37 = arith.maximumf %35, %36 : vector<16x128xf32>
    %c0_31 = arith.constant 0 : index
    %c0_32 = arith.constant 0 : index
    %c0_33 = arith.constant 0 : index
    %38 = vector.load %arg8[%c0_31, %c0_32, %c0_33] : memref<1x16x128xf32, #tpu.memory_space<vmem>>, vector<1x16x128xf32>
    %39 = vector.shape_cast %38 : vector<1x16x128xf32> to vector<16x128xf32>
    %40 = vector.shape_cast %37 : vector<16x128xf32> to vector<1x16x128xf32>
    tpu.vector_store %arg8[%c0_31, %c0_32, %c0_33], %40 {strides = array<i32>} : memref<1x16x128xf32, #tpu.memory_space<vmem>>, vector<1x16x128xf32>,
    return
  }
  func.func @transform_0(%arg0: i32) -> (i32, i32, i32) {
    %c0_i32 = arith.constant 0 : i32
    %c0_i32_0 = arith.constant 0 : i32
    %c0_i32_1 = arith.constant 0 : i32
    return %arg0, %c0_i32, %c0_i32_0 : i32, i32, i32
  }
  func.func @transform_1(%arg0: i32) -> (i32, i32) {
    %c0_i32 = arith.constant 0 : i32
    %c0_i32_0 = arith.constant 0 : i32
    %c0_i32_1 = arith.constant 0 : i32
    return %c0_i32, %c0_i32_0 : i32, i32
  }
  func.func @transform_2(%arg0: i32) -> (i32, i32) {
    %c0_i32 = arith.constant 0 : i32
    %c0_i32_0 = arith.constant 0 : i32
    %c0_i32_1 = arith.constant 0 : i32
    return %c0_i32, %c0_i32_0 : i32, i32
  }
  func.func @transform_3(%arg0: i32) -> (i32, i32) {
    %c0_i32 = arith.constant 0 : i32
    %c0_i32_0 = arith.constant 0 : i32
    %c0_i32_1 = arith.constant 0 : i32
    return %c0_i32, %c0_i32_0 : i32, i32
  }
  func.func @transform_4(%arg0: i32) -> (i32, i32) {
    %c0_i32 = arith.constant 0 : i32
    %c0_i32_0 = arith.constant 0 : i32
    %c0_i32_1 = arith.constant 0 : i32
    return %c0_i32, %c0_i32_0 : i32, i32
  }
  func.func @transform_5(%arg0: i32) -> (i32, i32) {
    %c0_i32 = arith.constant 0 : i32
    %c0_i32_0 = arith.constant 0 : i32
    %c0_i32_1 = arith.constant 0 : i32
    return %c0_i32, %c0_i32_0 : i32, i32
  }
  func.func @transform_6(%arg0: i32) -> (i32, i32) {
    %c0_i32 = arith.constant 0 : i32
    %c0_i32_0 = arith.constant 0 : i32
    %c0_i32_1 = arith.constant 0 : i32
    return %c0_i32, %c0_i32_0 : i32, i32
  }
  func.func @transform_7(%arg0: i32) -> (i32, i32, i32) {
    %c0_i32 = arith.constant 0 : i32
    %c0_i32_0 = arith.constant 0 : i32
    %c0_i32_1 = arith.constant 0 : i32
    return %arg0, %c0_i32, %c0_i32_0 : i32, i32, i32
  }
}

</mosaic_0001>

<llo_original>
// kernel: resblock_forward.1
$region0: #{resblock_forward.1}
  #allocation0 [shape = 'u32[]', space=smem, size = 0x4, offset = 0x4, fixed_abs, tag = 'smem constant byte address 0x4 - core index']
  #allocation1 [shape = 'u32[144,128]{1,0:T(1,128)}', space=vmem, size = 0x12000, scoped, tag = 'internal scratch']
  #allocation2 [shape = 'f32[18,128]{1,0:T(8,128)}', space=vmem, size = 0x3000, scoped, tag = 'scratch operand']
  %s0 = inlined_call_operand.vmem [shape: bf16[2,16,192], index: 0, kind: input, shape index: {}]
  %s1 = inlined_call_operand.vmem [shape: bf16[192,128], index: 1, kind: input, shape index: {}]
  %s2 = inlined_call_operand.vmem [shape: f32[1,128], index: 2, kind: input, shape index: {}]
  %s3 = inlined_call_operand.vmem [shape: bf16[384,128], index: 3, kind: input, shape index: {}]
  %s4 = inlined_call_operand.vmem [shape: f32[1,128], index: 4, kind: input, shape index: {}]
  %s5 = inlined_call_operand.vmem [shape: bf16[64,128], index: 5, kind: input, shape index: {}]
  %s6 = inlined_call_operand.vmem [shape: f32[1,128], index: 6, kind: input, shape index: {}]
  %s7 = inlined_call_operand.hbm [shape: f32[2,16,128], index: 7, kind: output, shape index: {}]
  %s8 = sld [smem:[#allocation0]]
  $region61: #{resblock_forward.1} parent=0
    _
  %s10 = ssub.s32 1, %s8
  %s11 = scalar_select 0, %s10, %s8
  $region1: #{resblock_forward.1} parent=0
    #allocation3 [shape = 'u8[16384]{0}', space=vmem, size = 0x4000, scoped, tag = 'output window, operand 0']
    #allocation4 [shape = 's32[2]{0}', space=sflag, size = 0x8, scoped, tag = 'scoped memory for resblock_forward.1']
    %12 = vsyncpa [#allocation4], 0
    %s13 = scalar_lea.sflag [#allocation4], 1
    %14 = vsyncpa %s13, 0
    loop: start=0, step=1, limit=4
    $region2: #{resblock_forward.1} parent=1 // loop_pre_header
      _
    $region3: #{resblock_forward.1} parent=1 // loop_header
      %s16 = sphi 0, %s20
      %p17 = scmp.ge.s32.totalorder %s16, 4
      %s26 = sphi 0, %s28
      %s29 = sphi 0, %s26
      %s30 = sphi 0, %s29
      %s46 = sphi 0, %s30
      %s50 = sphi 0, %s50
      %s52 = sphi 0, %s50
      %s53 = sphi 0, %s52
      %s67 = sphi 0, %s53
      %s71 = sphi 0, %s71
      %s73 = sphi 0, %s71
      %s74 = sphi 0, %s73
      %s88 = sphi 0, %s74
      %s92 = sphi 0, %s92
      %s94 = sphi 0, %s92
      %s95 = sphi 0, %s94
      %s109 = sphi 0, %s95
      %s113 = sphi 0, %s113
      %s115 = sphi 0, %s113
      %s116 = sphi 0, %s115
      %s130 = sphi 0, %s116
      %s134 = sphi 0, %s134
      %s136 = sphi 0, %s134
      %s137 = sphi 0, %s136
      %s151 = sphi 0, %s137
      %s155 = sphi 0, %s155
      %s157 = sphi 0, %s155
      %s158 = sphi 0, %s157
      %s172 = sphi 0, %s158
      %s178 = sphi 0, %s180
      %s181 = sphi 0, %s178
      %s182 = sphi 0, %s181
      %s198 = sphi 0, %s182
    $region4: #{resblock_forward.1} parent=1 // loop_header_branch
      %19 = sbr.rel (%p17) target = $region8
    $region5: #{resblock_forward.1} parent=1 // loop_body
      %s21 = ssub.s32 %s16, 1
      %s22 = ssub.s32 %s16, 2
      %s23 = sadd.s32 %s16, 1
      %s24 = ssub.s32 %s16, %s23
      %p25 = scmp.eq.s32.totalorder %s24, 0
      %s27 = sadd.s32 %s26, 1
      %s28 = scalar_select %p25, %s26, %s27
      %p31 = pneg %p25
      %p32 = scmp.eq.s32.totalorder %s16, 1
      %p33 = por %p31, %p32
      %p34 = scmp.ne.s32.totalorder %s26, %s29
      %p35 = scmp.eq.s32.totalorder %s16, 0
      %p36 = por %p34, %p35
      %p37 = scmp.ne.s32.totalorder %s26, %s29
      %p38 = scmp.eq.s32.totalorder %s21, 1
      %p39 = por %p37, %p38
      %p40 = scmp.ne.s32.totalorder %s29, %s30
      %p41 = scmp.eq.s32.totalorder %s21, 0
      %p42 = por %p40, %p41
      %p43 = scmp.ne.s32.totalorder %s29, %s30
      %p44 = scmp.eq.s32.totalorder %s22, 1
      %p45 = por %p43, %p44
      %p47 = scmp.ne.s32.totalorder %s30, %s46
      %p48 = scmp.eq.s32.totalorder %s22, 0
      %p49 = por %p47, %p48
      %s51 = sadd.s32 %s50, 1
      %p54 = scmp.eq.s32.totalorder %s16, 1
      %p55 = scmp.ne.s32.totalorder %s50, %s52
      %p56 = scmp.eq.s32.totalorder %s16, 0
      %p57 = por %p55, %p56
      %p58 = scmp.ne.s32.totalorder %s50, %s52
      %p59 = scmp.eq.s32.totalorder %s21, 1
      %p60 = por %p58, %p59
      %p61 = scmp.ne.s32.totalorder %s52, %s53
      %p62 = scmp.eq.s32.totalorder %s21, 0
      %p63 = por %p61, %p62
      %p64 = scmp.ne.s32.totalorder %s52, %s53
      %p65 = scmp.eq.s32.totalorder %s22, 1
      %p66 = por %p64, %p65
      %p68 = scmp.ne.s32.totalorder %s53, %s67
      %p69 = scmp.eq.s32.totalorder %s22, 0
      %p70 = por %p68, %p69
      %s72 = sadd.s32 %s71, 1
      %p75 = scmp.eq.s32.totalorder %s16, 1
      %p76 = scmp.ne.s32.totalorder %s71, %s73
      %p77 = scmp.eq.s32.totalorder %s16, 0
      %p78 = por %p76, %p77
      %p79 = scmp.ne.s32.totalorder %s71, %s73
      %p80 = scmp.eq.s32.totalorder %s21, 1
      %p81 = por %p79, %p80
      %p82 = scmp.ne.s32.totalorder %s73, %s74
      %p83 = scmp.eq.s32.totalorder %s21, 0
      %p84 = por %p82, %p83
      %p85 = scmp.ne.s32.totalorder %s73, %s74
      %p86 = scmp.eq.s32.totalorder %s22, 1
      %p87 = por %p85, %p86
      %p89 = scmp.ne.s32.totalorder %s74, %s88
      %p90 = scmp.eq.s32.totalorder %s22, 0
      %p91 = por %p89, %p90
      %s93 = sadd.s32 %s92, 1
      %p96 = scmp.eq.s32.totalorder %s16, 1
      %p97 = scmp.ne.s32.totalorder %s92, %s94
      %p98 = scmp.eq.s32.totalorder %s16, 0
      %p99 = por %p97, %p98
      %p100 = scmp.ne.s32.totalorder %s92, %s94
      %p101 = scmp.eq.s32.totalorder %s21, 1
      %p102 = por %p100, %p101
      %p103 = scmp.ne.s32.totalorder %s94, %s95
      %p104 = scmp.eq.s32.totalorder %s21, 0
      %p105 = por %p103, %p104
      %p106 = scmp.ne.s32.totalorder %s94, %s95
      %p107 = scmp.eq.s32.totalorder %s22, 1
      %p108 = por %p106, %p107
      %p110 = scmp.ne.s32.totalorder %s95, %s109
      %p111 = scmp.eq.s32.totalorder %s22, 0
      %p112 = por %p110, %p111
      %s114 = sadd.s32 %s113, 1
      %p117 = scmp.eq.s32.totalorder %s16, 1
      %p118 = scmp.ne.s32.totalorder %s113, %s115
      %p119 = scmp.eq.s32.totalorder %s16, 0
      %p120 = por %p118, %p119
      %p121 = scmp.ne.s32.totalorder %s113, %s115
      %p122 = scmp.eq.s32.totalorder %s21, 1
      %p123 = por %p121, %p122
      %p124 = scmp.ne.s32.totalorder %s115, %s116
      %p125 = scmp.eq.s32.totalorder %s21, 0
      %p126 = por %p124, %p125
      %p127 = scmp.ne.s32.totalorder %s115, %s116
      %p128 = scmp.eq.s32.totalorder %s22, 1
      %p129 = por %p127, %p128
      %p131 = scmp.ne.s32.totalorder %s116, %s130
      %p132 = scmp.eq.s32.totalorder %s22, 0
      %p133 = por %p131, %p132
      %s135 = sadd.s32 %s134, 1
      %p138 = scmp.eq.s32.totalorder %s16, 1
      %p139 = scmp.ne.s32.totalorder %s134, %s136
      %p140 = scmp.eq.s32.totalorder %s16, 0
      %p141 = por %p139, %p140
      %p142 = scmp.ne.s32.totalorder %s134, %s136
      %p143 = scmp.eq.s32.totalorder %s21, 1
      %p144 = por %p142, %p143
      %p145 = scmp.ne.s32.totalorder %s136, %s137
      %p146 = scmp.eq.s32.totalorder %s21, 0
      %p147 = por %p145, %p146
      %p148 = scmp.ne.s32.totalorder %s136, %s137
      %p149 = scmp.eq.s32.totalorder %s22, 1
      %p150 = por %p148, %p149
      %p152 = scmp.ne.s32.totalorder %s137, %s151
      %p153 = scmp.eq.s32.totalorder %s22, 0
      %p154 = por %p152, %p153
      %s156 = sadd.s32 %s155, 1
      %p159 = scmp.eq.s32.totalorder %s16, 1
      %p160 = scmp.ne.s32.totalorder %s155, %s157
      %p161 = scmp.eq.s32.totalorder %s16, 0
      %p162 = por %p160, %p161
      %p163 = scmp.ne.s32.totalorder %s155, %s157
      %p164 = scmp.eq.s32.totalorder %s21, 1
      %p165 = por %p163, %p164
      %p166 = scmp.ne.s32.totalorder %s157, %s158
      %p167 = scmp.eq.s32.totalorder %s21, 0
      %p168 = por %p166, %p167
      %p169 = scmp.ne.s32.totalorder %s157, %s158
      %p170 = scmp.eq.s32.totalorder %s22, 1
      %p171 = por %p169, %p170
      %p173 = scmp.ne.s32.totalorder %s158, %s172
      %p174 = scmp.eq.s32.totalorder %s22, 0
      %p175 = por %p173, %p174
      %s176 = ssub.s32 %s16, %s23
      %p177 = scmp.eq.s32.totalorder %s176, 0
      %s179 = sadd.s32 %s178, 1
      %s180 = scalar_select %p177, %s178, %s179
      %p183 = pneg %p177
      %p184 = scmp.eq.s32.totalorder %s16, 1
      %p185 = por %p183, %p184
      %p186 = scmp.ne.s32.totalorder %s178, %s181
      %p187 = scmp.eq.s32.totalorder %s16, 0
      %p188 = por %p186, %p187
      %p189 = scmp.ne.s32.totalorder %s178, %s181
      %p190 = scmp.eq.s32.totalorder %s21, 1
      %p191 = por %p189, %p190
      %p192 = scmp.ne.s32.totalorder %s181, %s182
      %p193 = scmp.eq.s32.totalorder %s21, 0
      %p194 = por %p192, %p193
      %p195 = scmp.ne.s32.totalorder %s181, %s182
      %p196 = scmp.eq.s32.totalorder %s22, 1
      %p197 = por %p195, %p196
      %p199 = scmp.ne.s32.totalorder %s182, %s198
      %p200 = scmp.eq.s32.totalorder %s22, 0
      %p201 = por %p199, %p200
      %p202 = scmp.le.s32.totalorder 1, %s16
      %p203 = scmp.lt.s32.totalorder %s16, 3
      %p204 = pnand %p202, %p203
      %p205 = pneg %p204
      // Predicated region
      $region9: #{resblock_forward.1} parent=5 // pred_check
        _
      $region10: #{resblock_forward.1} parent=5 // pred_check_branch
        %207 = sbr.rel (%p204) target = $region12
      $region11: #{resblock_forward.1} parent=5 // pred_region
        %s208 = ssub.s32 %s16, 1
        // Predicated region
        $region13: #{resblock_forward.1} parent=11 // pred_check
          %p209 = pneg %p63
        $region14: #{resblock_forward.1} parent=11 // pred_check_branch
          %211 = sbr.rel (%p209) target = $region16
        $region15: #{resblock_forward.1} parent=11 // pred_region
          _
        $region16: #{resblock_forward.1} parent=11 // pred_fallthru
          _
        // Predicated region
        $region17: #{resblock_forward.1} parent=11 // pred_check
          %p212 = pneg %p84
        $region18: #{resblock_forward.1} parent=11 // pred_check_branch
          %214 = sbr.rel (%p212) target = $region20
        $region19: #{resblock_forward.1} parent=11 // pred_region
          _
        $region20: #{resblock_forward.1} parent=11 // pred_fallthru
          _
        // Predicated region
        $region21: #{resblock_forward.1} parent=11 // pred_check
          %p215 = pneg %p105
        $region22: #{resblock_forward.1} parent=11 // pred_check_branch
          %217 = sbr.rel (%p215) target = $region24
        $region23: #{resblock_forward.1} parent=11 // pred_region
          _
        $region24: #{resblock_forward.1} parent=11 // pred_fallthru
          _
        // Predicated region
        $region25: #{resblock_forward.1} parent=11 // pred_check
          %p218 = pneg %p126
        $region26: #{resblock_forward.1} parent=11 // pred_check_branch
          %220 = sbr.rel (%p218) target = $region28
        $region27: #{resblock_forward.1} parent=11 // pred_region
          _
        $region28: #{resblock_forward.1} parent=11 // pred_fallthru
          _
        // Predicated region
        $region29: #{resblock_forward.1} parent=11 // pred_check
          %p221 = pneg %p147
        $region30: #{resblock_forward.1} parent=11 // pred_check_branch
          %223 = sbr.rel (%p221) target = $region32
        $region31: #{resblock_forward.1} parent=11 // pred_region
          _
        $region32: #{resblock_forward.1} parent=11 // pred_fallthru
          _
        // Predicated region
        $region33: #{resblock_forward.1} parent=11 // pred_check
          %p224 = pneg %p168
        $region34: #{resblock_forward.1} parent=11 // pred_check_branch
          %226 = sbr.rel (%p224) target = $region36
        $region35: #{resblock_forward.1} parent=11 // pred_region
          _
        $region36: #{resblock_forward.1} parent=11 // pred_fallthru
          _
      $region12: #{resblock_forward.1} parent=5 // pred_fallthru
        _
      %p227 = scmp.lt.s32.totalorder %s16, 2
      // Predicated region
      $region37: #{resblock_forward.1} parent=5 // pred_check
        %p228 = pneg %p227
      $region38: #{resblock_forward.1} parent=5 // pred_check_branch
        %230 = sbr.rel (%p228) target = $region40
      $region39: #{resblock_forward.1} parent=5 // pred_region
        // Predicated region
        $region41: #{resblock_forward.1} parent=39 // pred_check
          %p231 = pneg %p36
        $region42: #{resblock_forward.1} parent=39 // pred_check_branch
          %233 = sbr.rel (%p231) target = $region44
        $region43: #{resblock_forward.1} parent=39 // pred_region
          %p234 = scmp.lt.s32.totalorder %s16, 1
          %s235 = scalar_select %p234, %s16, 1
          %s236 = smul.addr %s235, 4
          %s237 = smul.addr %s236, 4
          %s238 = scalar_lea.vmem %s0, %s237
        $region44: #{resblock_forward.1} parent=39 // pred_fallthru
          _
      $region40: #{resblock_forward.1} parent=5 // pred_fallthru
        _
      %p239 = scmp.le.s32.totalorder 1, %s16
      %p240 = scmp.lt.s32.totalorder %s16, 3
      %p241 = pnand %p239, %p240
      %p242 = pneg %p241
      // Predicated region
      $region45: #{resblock_forward.1} parent=5 // pred_check
        _
      $region46: #{resblock_forward.1} parent=5 // pred_check_branch
        %244 = sbr.rel (%p241) target = $region48
      $region47: #{resblock_forward.1} parent=5 // pred_region
        %s245 = ssub.s32 %s16, 1
        %p246 = scmp.lt.s32.totalorder %s21, 1
        %s247 = scalar_select %p246, %s21, 1
        %s248 = smul.addr %s247, 4
        %s249 = smul.addr %s248, 4
        %s250 = scalar_lea.vmem %s0, %s249
        %p251 = pneg %p42
        %p252 = pneg %p39
        %p253 = pneg %p63
        %p254 = pneg %p60
        %p255 = pneg %p84
        %p256 = pneg %p81
        %p257 = pneg %p105
        %p258 = pneg %p102
        %p259 = pneg %p126
        %p260 = pneg %p123
        %p261 = pneg %p147
        %p262 = pneg %p144
        %p263 = pneg %p168
        %p264 = pneg %p165
        %p265 = pneg %p194
        %p266 = pneg %p191
        %s267 = sand.u32 %s181, 1
        %s268 = scalar_lea.sflag [#allocation4], %s267
        %s269 = sand.u32 %s181, 1
        %s270 = smul.addr %s269, 16
        %s271 = scalar_lea.vmem [#allocation3], %s270
        %p272 = scmp.lt.s32.totalorder %s21, 1
        %s273 = scalar_select %p272, %s21, 1
        %s274 = smul.addr %s273, 4
        %s275 = smul.addr %s274, 4
        %s276 = scalar_lea.vmem %s0, %s275
        %v278 = vld [vmem:[%s276] sm:$0xff]
        %v279 = vld [vmem:[%s276 + $0x8] sm:$0xff]
        %v280 = vld [vmem:[%s1] sm:$0xf]
        %v281 = vld [vmem:[%s1 + $0x4] sm:$0xf]
        %v282 = vld [vmem:[%s1 + $0x8] sm:$0xf]
        %v283 = vld [vmem:[%s1 + $0xc] sm:$0xf]
        %v284 = vld [vmem:[%s1 + $0x10] sm:$0xf]
        %v285 = vld [vmem:[%s1 + $0x14] sm:$0xf]
        %v286 = vld [vmem:[%s1 + $0x18] sm:$0xf]
        %v287 = vld [vmem:[%s1 + $0x1c] sm:$0xf]
        %v288 = vld [vmem:[%s1 + $0x20] sm:$0xf]
        %v289 = vld [vmem:[%s1 + $0x24] sm:$0xf]
        %v290 = vld [vmem:[%s1 + $0x28] sm:$0xf]
        %v291 = vld [vmem:[%s1 + $0x2c] sm:$0xf]
        %v292 = vld [vmem:[%s1 + $0x30] sm:$0xf]
        %v293 = vld [vmem:[%s1 + $0x34] sm:$0xf]
        %v294 = vld [vmem:[%s1 + $0x38] sm:$0xf]
        %v295 = vld [vmem:[%s1 + $0x3c] sm:$0xf]
        %v296 = vld [vmem:[%s1 + $0x40] sm:$0xf]
        %v297 = vld [vmem:[%s1 + $0x44] sm:$0xf]
        %v298 = vld [vmem:[%s1 + $0x48] sm:$0xf]
        %v299 = vld [vmem:[%s1 + $0x4c] sm:$0xf]
        %v300 = vld [vmem:[%s1 + $0x50] sm:$0xf]
        %v301 = vld [vmem:[%s1 + $0x54] sm:$0xf]
        %v302 = vld [vmem:[%s1 + $0x58] sm:$0xf]
        %v303 = vld [vmem:[%s1 + $0x5c] sm:$0xf]
        %v304 = vld [vmem:[%s2] sm:$0x1]
        %v306 = vlaneseq
        %v307 = vshrl.u32 %v306, 7
        %v308 = vsub.s32 0, %v307
        %v309 = vrot.slane %v304, %v308
        %v313 = vunpack.c.l.b16 %v278
        %v314 = vunpack.c.h.b16 %v278
        %v315 = vunpack.c.l.b16 %v279
        %v316 = vunpack.c.h.b16 %v279
        %v317 = vpack.c.b16 %v315, %v313
        %v318 = vpack.c.b16 %v316, %v314
        %v344 = vunpack.c.l.b16 %v280
        %v345 = vunpack.c.l.b16 %v281
        %v346 = vunpack.c.l.b16 %v282
        %v347 = vunpack.c.l.b16 %v283
        %v348 = vunpack.c.l.b16 %v284
        %v349 = vunpack.c.l.b16 %v285
        %v350 = vunpack.c.l.b16 %v286
        %v351 = vunpack.c.l.b16 %v287
        %v352 = vunpack.c.l.b16 %v288
        %v353 = vunpack.c.l.b16 %v289
        %v354 = vunpack.c.l.b16 %v290
        %v355 = vunpack.c.l.b16 %v291
        %v356 = vunpack.c.l.b16 %v292
        %v357 = vunpack.c.l.b16 %v293
        %v358 = vunpack.c.l.b16 %v294
        %v359 = vunpack.c.l.b16 %v295
        %v360 = vunpack.c.l.b16 %v296
        %v361 = vunpack.c.l.b16 %v297
        %v362 = vunpack.c.l.b16 %v298
        %v363 = vunpack.c.l.b16 %v299
        %v364 = vunpack.c.l.b16 %v300
        %v365 = vunpack.c.l.b16 %v301
        %v366 = vunpack.c.l.b16 %v302
        %v367 = vunpack.c.l.b16 %v303
        %v368 = vpack.c.b16 %v345, %v344
        %v369 = vpack.c.b16 %v347, %v346
        %v370 = vpack.c.b16 %v349, %v348
        %v371 = vpack.c.b16 %v351, %v350
        %v372 = vpack.c.b16 %v353, %v352
        %v373 = vpack.c.b16 %v355, %v354
        %v374 = vpack.c.b16 %v357, %v356
        %v375 = vpack.c.b16 %v359, %v358
        %v376 = vpack.c.b16 %v361, %v360
        %v377 = vpack.c.b16 %v363, %v362
        %v378 = vpack.c.b16 %v365, %v364
        %v379 = vpack.c.b16 %v367, %v366
        %vm392 = vcmask 523264
        %v394 = vsel %vm392, %v318, 0
        %396 = vmatprep.subr.bf16.mxu0 0
        %397 = vmatpush1.bf16.msra.mxu0 %v368
        %398 = vmatprep.subr.bf16.mxu0 0
        %399 = vmatpush1.bf16.msra.mxu0 %v369
        %400 = vmatprep.subr.bf16.mxu0 0
        %401 = vmatpush1.bf16.msra.mxu0 %v370
        %402 = vmatprep.subr.bf16.mxu0 0
        %403 = vmatpush1.bf16.msra.mxu0 %v371
        %404 = vmatprep.subr.bf16.mxu0 0
        %405 = vmatpush1.bf16.msra.mxu0 %v372
        %406 = vmatprep.subr.bf16.mxu0 0
        %407 = vmatpush1.bf16.msra.mxu0 %v373
        %408 = vmatprep.subr.bf16.mxu0 0
        %409 = vmatpush1.bf16.msra.mxu0 %v374
        %410 = vmatprep.subr.bf16.mxu0 0
        %411 = vmatpush1.bf16.msra.mxu0 %v375
        %412 = vmatprep.subr.bf16.mxu0 0
        %413 = vmatpush1.bf16.msra.mxu0 %v376
        %414 = vmatprep.subr.bf16.mxu0 0
        %415 = vmatpush1.bf16.msra.mxu0 %v377
        %416 = vmatprep.subr.bf16.mxu0 0
        %417 = vmatpush1.bf16.msra.mxu0 %v378
        %418 = vmatprep.subr.bf16.mxu0 0
        %419 = vmatpush1.bf16.msra.mxu0 %v379
        %420 = vmatprep.subr.bf16.mxu0 0
        %421 = vmatpush1.bf16.msra.mxu0 0
        %422 = vmatprep.subr.bf16.mxu0 0
        %423 = vmatpush1.bf16.msra.mxu0 0
        %424 = vmatprep.subr.bf16.mxu0 0
        %425 = vmatpush1.bf16.msra.mxu0 0
        %426 = vmatprep.subr.bf16.mxu0 0
        %427 = vmatpush1.bf16.msra.mxu0 0
        %428 = vmatprep.mubr.bf16.mxu0 %v394
        %429 = vmatmul.mubr.bf16.gmra.mrb[0].mxu0 %v317
        %v430 = vpop.f32.mrb[0].mxu0
        %v431 = vadd.f32 %v309, %v430
        %v432 = vpop.f32.mrb[0].mxu0
        %v433 = vpop.f32.mrb[0].mxu0
        %v434 = vadd.f32 %v309, %v433
        %v435 = vpop.f32.mrb[0].mxu0
        %436 = vdwg.mxu0
        %v437 = vmax.f32 %v431, 0.0
        %v438 = vmax.f32 %v434, 0.0
        %v439 = vld [vmem:[%s5] sm:$0xf]
        %v440 = vld [vmem:[%s5 + $0x4] sm:$0xf]
        %v441 = vld [vmem:[%s5 + $0x8] sm:$0xf]
        %v442 = vld [vmem:[%s5 + $0xc] sm:$0xf]
        %v443 = vld [vmem:[%s5 + $0x10] sm:$0xf]
        %v444 = vld [vmem:[%s5 + $0x14] sm:$0xf]
        %v445 = vld [vmem:[%s5 + $0x18] sm:$0xf]
        %v446 = vld [vmem:[%s5 + $0x1c] sm:$0xf]
        %v447 = vld [vmem:[%s6] sm:$0x1]
        %v449 = vlaneseq
        %v450 = vshrl.u32 %v449, 7
        %v451 = vsub.s32 0, %v450
        %v452 = vrot.slane %v447, %v451
        %454 = vrot.lane.b32.xlu0 %v317, 64
        %v455 = vpop.permute.xlu0 %454
        %v464 = vunpack.c.l.b16 %v439
        %v465 = vunpack.c.l.b16 %v440
        %v466 = vunpack.c.l.b16 %v441
        %v467 = vunpack.c.l.b16 %v442
        %v468 = vunpack.c.l.b16 %v443
        %v469 = vunpack.c.l.b16 %v444
        %v470 = vunpack.c.l.b16 %v445
        %v471 = vunpack.c.l.b16 %v446
        %v472 = vpack.c.b16 %v465, %v464
        %v473 = vpack.c.b16 %v467, %v466
        %v474 = vpack.c.b16 %v469, %v468
        %v475 = vpack.c.b16 %v471, %v470
        %v481 = vsel %vm392, %v455, 0
        %483 = vmatprep.subr.bf16.mxu0 0
        %484 = vmatpush1.bf16.msra.mxu0 %v472
        %485 = vmatprep.subr.bf16.mxu0 0
        %486 = vmatpush1.bf16.msra.mxu0 %v473
        %487 = vmatprep.subr.bf16.mxu0 0
        %488 = vmatpush1.bf16.msra.mxu0 %v474
        %489 = vmatprep.subr.bf16.mxu0 0
        %490 = vmatpush1.bf16.msra.mxu0 %v475
        %491 = vmatprep.subr.bf16.mxu0 0
        %492 = vmatpush1.bf16.msra.mxu0 0
        %493 = vmatprep.subr.bf16.mxu0 0
        %494 = vmatpush1.bf16.msra.mxu0 0
        %495 = vmatprep.subr.bf16.mxu0 0
        %496 = vmatpush1.bf16.msra.mxu0 0
        %497 = vmatprep.subr.bf16.mxu0 0
        %498 = vmatpush1.bf16.msra.mxu0 0
        %499 = vmatprep.subr.bf16.mxu0 0
        %500 = vmatpush1.bf16.msra.mxu0 0
        %501 = vmatprep.subr.bf16.mxu0 0
        %502 = vmatpush1.bf16.msra.mxu0 0
        %503 = vmatprep.subr.bf16.mxu0 0
        %504 = vmatpush1.bf16.msra.mxu0 0
        %505 = vmatprep.subr.bf16.mxu0 0
        %506 = vmatpush1.bf16.msra.mxu0 0
        %507 = vmatprep.subr.bf16.mxu0 0
        %508 = vmatpush1.bf16.msra.mxu0 0
        %509 = vmatprep.subr.bf16.mxu0 0
        %510 = vmatpush1.bf16.msra.mxu0 0
        %511 = vmatprep.subr.bf16.mxu0 0
        %512 = vmatpush1.bf16.msra.mxu0 0
        %513 = vmatprep.subr.bf16.mxu0 0
        %514 = vmatpush1.bf16.msra.mxu0 0
        %515 = vmatprep.mubr.bf16.mxu0 0
        %516 = vmatmul.mubr.bf16.gmra.mrb[0].mxu0 %v481
        %v517 = vpop.f32.mrb[0].mxu0
        %v518 = vadd.f32 %v452, %v517
        %v519 = vpop.f32.mrb[0].mxu0
        %v520 = vpop.f32.mrb[0].mxu0
        %v521 = vadd.f32 %v452, %v520
        %v522 = vpop.f32.mrb[0].mxu0
        %523 = vdwg.mxu0
        %524 = vst [vmem:[#allocation2] sm:$0xff] 0.0
        %525 = vst [vmem:[#allocation2 + $0x8] sm:$0xff] 0.0
        %526 = vst [vmem:[#allocation2 + $0x10] sm:$0x3] 0.0
        %527 = vst [vmem:[#allocation2 + $0x1] sm:$0xff] %v437
        %528 = vst [vmem:[#allocation2 + $0x9] sm:$0xff] %v438
        %v529 = vld [vmem:[%s4] sm:$0x1]
        %v531 = vlaneseq
        %v532 = vshrl.u32 %v531, 7
        %v533 = vsub.s32 0, %v532
        %v534 = vrot.slane %v529, %v533
        %v536 = vadd.f32 %v518, %v534
        %v537 = vadd.f32 %v521, %v534
        %v538 = vld [vmem:[#allocation2] sm:$0xff]
        %v539 = vld [vmem:[#allocation2 + $0x8] sm:$0xff]
        %v540 = vpack.c.bf16 %v539, %v538
        %v541 = vld [vmem:[%s3] sm:$0xf]
        %v542 = vld [vmem:[%s3 + $0x4] sm:$0xf]
        %v543 = vld [vmem:[%s3 + $0x8] sm:$0xf]
        %v544 = vld [vmem:[%s3 + $0xc] sm:$0xf]
        %v545 = vld [vmem:[%s3 + $0x10] sm:$0xf]
        %v546 = vld [vmem:[%s3 + $0x14] sm:$0xf]
        %v547 = vld [vmem:[%s3 + $0x18] sm:$0xf]
        %v548 = vld [vmem:[%s3 + $0x1c] sm:$0xf]
        %v549 = vld [vmem:[%s3 + $0x20] sm:$0xf]
        %v550 = vld [vmem:[%s3 + $0x24] sm:$0xf]
        %v551 = vld [vmem:[%s3 + $0x28] sm:$0xf]
        %v552 = vld [vmem:[%s3 + $0x2c] sm:$0xf]
        %v553 = vld [vmem:[%s3 + $0x30] sm:$0xf]
        %v554 = vld [vmem:[%s3 + $0x34] sm:$0xf]
        %v555 = vld [vmem:[%s3 + $0x38] sm:$0xf]
        %v556 = vld [vmem:[%s3 + $0x3c] sm:$0xf]
        %v573 = vunpack.c.l.b16 %v541
        %v574 = vunpack.c.l.b16 %v542
        %v575 = vunpack.c.l.b16 %v543
        %v576 = vunpack.c.l.b16 %v544
        %v577 = vunpack.c.l.b16 %v545
        %v578 = vunpack.c.l.b16 %v546
        %v579 = vunpack.c.l.b16 %v547
        %v580 = vunpack.c.l.b16 %v548
        %v581 = vunpack.c.l.b16 %v549
        %v582 = vunpack.c.l.b16 %v550
        %v583 = vunpack.c.l.b16 %v551
        %v584 = vunpack.c.l.b16 %v552
        %v585 = vunpack.c.l.b16 %v553
        %v586 = vunpack.c.l.b16 %v554
        %v587 = vunpack.c.l.b16 %v555
        %v588 = vunpack.c.l.b16 %v556
        %v589 = vpack.c.b16 %v574, %v573
        %v590 = vpack.c.b16 %v576, %v575
        %v591 = vpack.c.b16 %v578, %v577
        %v592 = vpack.c.b16 %v580, %v579
        %v593 = vpack.c.b16 %v582, %v581
        %v594 = vpack.c.b16 %v584, %v583
        %v595 = vpack.c.b16 %v586, %v585
        %v596 = vpack.c.b16 %v588, %v587
        %605 = vmatprep.subr.bf16.mxu0 0
        %606 = vmatpush1.bf16.msra.mxu0 %v589
        %607 = vmatprep.subr.bf16.mxu0 0
        %608 = vmatpush1.bf16.msra.mxu0 %v590
        %609 = vmatprep.subr.bf16.mxu0 0
        %610 = vmatpush1.bf16.msra.mxu0 %v591
        %611 = vmatprep.subr.bf16.mxu0 0
        %612 = vmatpush1.bf16.msra.mxu0 %v592
        %613 = vmatprep.subr.bf16.mxu0 0
        %614 = vmatpush1.bf16.msra.mxu0 %v593
        %615 = vmatprep.subr.bf16.mxu0 0
        %616 = vmatpush1.bf16.msra.mxu0 %v594
        %617 = vmatprep.subr.bf16.mxu0 0
        %618 = vmatpush1.bf16.msra.mxu0 %v595
        %619 = vmatprep.subr.bf16.mxu0 0
        %620 = vmatpush1.bf16.msra.mxu0 %v596
        %621 = vmatprep.subr.bf16.mxu0 0
        %622 = vmatpush1.bf16.msra.mxu0 0
        %623 = vmatprep.subr.bf16.mxu0 0
        %624 = vmatpush1.bf16.msra.mxu0 0
        %625 = vmatprep.subr.bf16.mxu0 0
        %626 = vmatpush1.bf16.msra.mxu0 0
        %627 = vmatprep.subr.bf16.mxu0 0
        %628 = vmatpush1.bf16.msra.mxu0 0
        %629 = vmatprep.subr.bf16.mxu0 0
        %630 = vmatpush1.bf16.msra.mxu0 0
        %631 = vmatprep.subr.bf16.mxu0 0
        %632 = vmatpush1.bf16.msra.mxu0 0
        %633 = vmatprep.subr.bf16.mxu0 0
        %634 = vmatpush1.bf16.msra.mxu0 0
        %635 = vmatprep.subr.bf16.mxu0 0
        %636 = vmatpush1.bf16.msra.mxu0 0
        %637 = vmatprep.mubr.bf16.mxu0 0
        %638 = vmatmul.mubr.bf16.gmra.mrb[0].mxu0 %v540
        %v639 = vpop.f32.mrb[0].mxu0
        %v640 = vadd.f32 0.0, %v639
        %v641 = vpop.f32.mrb[0].mxu0
        %v642 = vpop.f32.mrb[0].mxu0
        %v643 = vadd.f32 0.0, %v642
        %v644 = vpop.f32.mrb[0].mxu0
        %645 = vdwg.mxu0
        %v646 = vadd.f32 %v536, %v640
        %v647 = vadd.f32 %v537, %v643
        %v648 = vld [vmem:[#allocation2 + $0x1] sm:$0xff]
        %v649 = vld [vmem:[#allocation2 + $0x9] sm:$0xff]
        %v650 = vpack.c.bf16 %v649, %v648
        %v651 = vld [vmem:[%s3 + $0x40] sm:$0xf]
        %v652 = vld [vmem:[%s3 + $0x44] sm:$0xf]
        %v653 = vld [vmem:[%s3 + $0x48] sm:$0xf]
        %v654 = vld [vmem:[%s3 + $0x4c] sm:$0xf]
        %v655 = vld [vmem:[%s3 + $0x50] sm:$0xf]
        %v656 = vld [vmem:[%s3 + $0x54] sm:$0xf]
        %v657 = vld [vmem:[%s3 + $0x58] sm:$0xf]
        %v658 = vld [vmem:[%s3 + $0x5c] sm:$0xf]
        %v659 = vld [vmem:[%s3 + $0x60] sm:$0xf]
        %v660 = vld [vmem:[%s3 + $0x64] sm:$0xf]
        %v661 = vld [vmem:[%s3 + $0x68] sm:$0xf]
        %v662 = vld [vmem:[%s3 + $0x6c] sm:$0xf]
        %v663 = vld [vmem:[%s3 + $0x70] sm:$0xf]
        %v664 = vld [vmem:[%s3 + $0x74] sm:$0xf]
        %v665 = vld [vmem:[%s3 + $0x78] sm:$0xf]
        %v666 = vld [vmem:[%s3 + $0x7c] sm:$0xf]
        %v683 = vunpack.c.l.b16 %v651
        %v684 = vunpack.c.l.b16 %v652
        %v685 = vunpack.c.l.b16 %v653
        %v686 = vunpack.c.l.b16 %v654
        %v687 = vunpack.c.l.b16 %v655
        %v688 = vunpack.c.l.b16 %v656
        %v689 = vunpack.c.l.b16 %v657
        %v690 = vunpack.c.l.b16 %v658
        %v691 = vunpack.c.l.b16 %v659
        %v692 = vunpack.c.l.b16 %v660
        %v693 = vunpack.c.l.b16 %v661
        %v694 = vunpack.c.l.b16 %v662
        %v695 = vunpack.c.l.b16 %v663
        %v696 = vunpack.c.l.b16 %v664
        %v697 = vunpack.c.l.b16 %v665
        %v698 = vunpack.c.l.b16 %v666
        %v699 = vpack.c.b16 %v684, %v683
        %v700 = vpack.c.b16 %v686, %v685
        %v701 = vpack.c.b16 %v688, %v687
        %v702 = vpack.c.b16 %v690, %v689
        %v703 = vpack.c.b16 %v692, %v691
        %v704 = vpack.c.b16 %v694, %v693
        %v705 = vpack.c.b16 %v696, %v695
        %v706 = vpack.c.b16 %v698, %v697
        %715 = vmatprep.subr.bf16.mxu0 0
        %716 = vmatpush1.bf16.msra.mxu0 %v699
        %717 = vmatprep.subr.bf16.mxu0 0
        %718 = vmatpush1.bf16.msra.mxu0 %v700
        %719 = vmatprep.subr.bf16.mxu0 0
        %720 = vmatpush1.bf16.msra.mxu0 %v701
        %721 = vmatprep.subr.bf16.mxu0 0
        %722 = vmatpush1.bf16.msra.mxu0 %v702
        %723 = vmatprep.subr.bf16.mxu0 0
        %724 = vmatpush1.bf16.msra.mxu0 %v703
        %725 = vmatprep.subr.bf16.mxu0 0
        %726 = vmatpush1.bf16.msra.mxu0 %v704
        %727 = vmatprep.subr.bf16.mxu0 0
        %728 = vmatpush1.bf16.msra.mxu0 %v705
        %729 = vmatprep.subr.bf16.mxu0 0
        %730 = vmatpush1.bf16.msra.mxu0 %v706
        %731 = vmatprep.subr.bf16.mxu0 0
        %732 = vmatpush1.bf16.msra.mxu0 0
        %733 = vmatprep.subr.bf16.mxu0 0
        %734 = vmatpush1.bf16.msra.mxu0 0
        %735 = vmatprep.subr.bf16.mxu0 0
        %736 = vmatpush1.bf16.msra.mxu0 0
        %737 = vmatprep.subr.bf16.mxu0 0
        %738 = vmatpush1.bf16.msra.mxu0 0
        %739 = vmatprep.subr.bf16.mxu0 0
        %740 = vmatpush1.bf16.msra.mxu0 0
        %741 = vmatprep.subr.bf16.mxu0 0
        %742 = vmatpush1.bf16.msra.mxu0 0
        %743 = vmatprep.subr.bf16.mxu0 0
        %744 = vmatpush1.bf16.msra.mxu0 0
        %745 = vmatprep.subr.bf16.mxu0 0
        %746 = vmatpush1.bf16.msra.mxu0 0
        %747 = vmatprep.mubr.bf16.mxu0 0
        %748 = vmatmul.mubr.bf16.gmra.mrb[0].mxu0 %v650
        %v749 = vpop.f32.mrb[0].mxu0
        %v750 = vadd.f32 0.0, %v749
        %v751 = vpop.f32.mrb[0].mxu0
        %v752 = vpop.f32.mrb[0].mxu0
        %v753 = vadd.f32 0.0, %v752
        %v754 = vpop.f32.mrb[0].mxu0
        %755 = vdwg.mxu0
        %v756 = vadd.f32 %v646, %v750
        %v757 = vadd.f32 %v647, %v753
        %v758 = vld [vmem:[#allocation2 + $0x2] sm:$0xff]
        %v759 = vld [vmem:[#allocation2 + $0xa] sm:$0xff]
        %v760 = vpack.c.bf16 %v759, %v758
        %v761 = vld [vmem:[%s3 + $0x80] sm:$0xf]
        %v762 = vld [vmem:[%s3 + $0x84] sm:$0xf]
        %v763 = vld [vmem:[%s3 + $0x88] sm:$0xf]
        %v764 = vld [vmem:[%s3 + $0x8c] sm:$0xf]
        %v765 = vld [vmem:[%s3 + $0x90] sm:$0xf]
        %v766 = vld [vmem:[%s3 + $0x94] sm:$0xf]
        %v767 = vld [vmem:[%s3 + $0x98] sm:$0xf]
        %v768 = vld [vmem:[%s3 + $0x9c] sm:$0xf]
        %v769 = vld [vmem:[%s3 + $0xa0] sm:$0xf]
        %v770 = vld [vmem:[%s3 + $0xa4] sm:$0xf]
        %v771 = vld [vmem:[%s3 + $0xa8] sm:$0xf]
        %v772 = vld [vmem:[%s3 + $0xac] sm:$0xf]
        %v773 = vld [vmem:[%s3 + $0xb0] sm:$0xf]
        %v774 = vld [vmem:[%s3 + $0xb4] sm:$0xf]
        %v775 = vld [vmem:[%s3 + $0xb8] sm:$0xf]
        %v776 = vld [vmem:[%s3 + $0xbc] sm:$0xf]
        %v793 = vunpack.c.l.b16 %v761
        %v794 = vunpack.c.l.b16 %v762
        %v795 = vunpack.c.l.b16 %v763
        %v796 = vunpack.c.l.b16 %v764
        %v797 = vunpack.c.l.b16 %v765
        %v798 = vunpack.c.l.b16 %v766
        %v799 = vunpack.c.l.b16 %v767
        %v800 = vunpack.c.l.b16 %v768
        %v801 = vunpack.c.l.b16 %v769
        %v802 = vunpack.c.l.b16 %v770
        %v803 = vunpack.c.l.b16 %v771
        %v804 = vunpack.c.l.b16 %v772
        %v805 = vunpack.c.l.b16 %v773
        %v806 = vunpack.c.l.b16 %v774
        %v807 = vunpack.c.l.b16 %v775
        %v808 = vunpack.c.l.b16 %v776
        %v809 = vpack.c.b16 %v794, %v793
        %v810 = vpack.c.b16 %v796, %v795
        %v811 = vpack.c.b16 %v798, %v797
        %v812 = vpack.c.b16 %v800, %v799
        %v813 = vpack.c.b16 %v802, %v801
        %v814 = vpack.c.b16 %v804, %v803
        %v815 = vpack.c.b16 %v806, %v805
        %v816 = vpack.c.b16 %v808, %v807
        %825 = vmatprep.subr.bf16.mxu0 0
        %826 = vmatpush1.bf16.msra.mxu0 %v809
        %827 = vmatprep.subr.bf16.mxu0 0
        %828 = vmatpush1.bf16.msra.mxu0 %v810
        %829 = vmatprep.subr.bf16.mxu0 0
        %830 = vmatpush1.bf16.msra.mxu0 %v811
        %831 = vmatprep.subr.bf16.mxu0 0
        %832 = vmatpush1.bf16.msra.mxu0 %v812
        %833 = vmatprep.subr.bf16.mxu0 0
        %834 = vmatpush1.bf16.msra.mxu0 %v813
        %835 = vmatprep.subr.bf16.mxu0 0
        %836 = vmatpush1.bf16.msra.mxu0 %v814
        %837 = vmatprep.subr.bf16.mxu0 0
        %838 = vmatpush1.bf16.msra.mxu0 %v815
        %839 = vmatprep.subr.bf16.mxu0 0
        %840 = vmatpush1.bf16.msra.mxu0 %v816
        %841 = vmatprep.subr.bf16.mxu0 0
        %842 = vmatpush1.bf16.msra.mxu0 0
        %843 = vmatprep.subr.bf16.mxu0 0
        %844 = vmatpush1.bf16.msra.mxu0 0
        %845 = vmatprep.subr.bf16.mxu0 0
        %846 = vmatpush1.bf16.msra.mxu0 0
        %847 = vmatprep.subr.bf16.mxu0 0
        %848 = vmatpush1.bf16.msra.mxu0 0
        %849 = vmatprep.subr.bf16.mxu0 0
        %850 = vmatpush1.bf16.msra.mxu0 0
        %851 = vmatprep.subr.bf16.mxu0 0
        %852 = vmatpush1.bf16.msra.mxu0 0
        %853 = vmatprep.subr.bf16.mxu0 0
        %854 = vmatpush1.bf16.msra.mxu0 0
        %855 = vmatprep.subr.bf16.mxu0 0
        %856 = vmatpush1.bf16.msra.mxu0 0
        %857 = vmatprep.mubr.bf16.mxu0 0
        %858 = vmatmul.mubr.bf16.gmra.mrb[0].mxu0 %v760
        %v859 = vpop.f32.mrb[0].mxu0
        %v860 = vadd.f32 0.0, %v859
        %v861 = vpop.f32.mrb[0].mxu0
        %v862 = vpop.f32.mrb[0].mxu0
        %v863 = vadd.f32 0.0, %v862
        %v864 = vpop.f32.mrb[0].mxu0
        %865 = vdwg.mxu0
        %v866 = vadd.f32 %v756, %v860
        %v867 = vadd.f32 %v757, %v863
        %v868 = vmax.f32 %v866, 0.0
        %v869 = vmax.f32 %v867, 0.0
        %870 = vst [vmem:[%s271] sm:$0xff] %v868
        %871 = vst [vmem:[%s271 + $0x8] sm:$0xff] %v869
        %s872 = sand.u32 %s181, 1
        %s873 = scalar_lea.sflag [#allocation4], %s872
        %s874 = sand.u32 %s181, 1
        %s875 = smul.addr %s874, 16
        %s876 = scalar_lea.vmem [#allocation3], %s875
        // Predicated region
        $region49: #{resblock_forward.1} parent=47 // pred_check
          %p877 = pneg %p191
        $region50: #{resblock_forward.1} parent=47 // pred_check_branch
          %879 = sbr.rel (%p877) target = $region52
        $region51: #{resblock_forward.1} parent=47 // pred_region
          %s881 = ssub.s32 256, 256
          %882 = vsyncadd %s873, %s881
          %s883 = smul.addr %s21, 2
          %s884 = smul.addr %s883, 128
          %s885 = scalar_lea.hbm %s7, %s884
          %s886 = sshll.u32 %s876, 4
          %s887 = int_to_ptr.vmem [resolvable:$true] %s886
          %892 = dma.vmem_to_hbm [thread:$0]  %s887, 256, %s885, %s873, 128, 128, 8
        $region52: #{resblock_forward.1} parent=47 // pred_fallthru
          _
      $region48: #{resblock_forward.1} parent=5 // pred_fallthru
        _
      %p893 = scmp.le.s32.totalorder 2, %s16
      // Predicated region
      $region53: #{resblock_forward.1} parent=5 // pred_check
        %p894 = pneg %p893
      $region54: #{resblock_forward.1} parent=5 // pred_check_branch
        %896 = sbr.rel (%p894) target = $region56
      $region55: #{resblock_forward.1} parent=5 // pred_region
        %s897 = ssub.s32 %s16, 2
        // Predicated region
        $region57: #{resblock_forward.1} parent=55 // pred_check
          %p898 = pneg %p197
        $region58: #{resblock_forward.1} parent=55 // pred_check_branch
          %900 = sbr.rel (%p898) target = $region60
        $region59: #{resblock_forward.1} parent=55 // pred_region
          %s901 = sand.u32 %s182, 1
          %s902 = scalar_lea.sflag [#allocation4], %s901
          %s903 = sand.u32 %s182, 1
          %s904 = smul.addr %s903, 16
          %s905 = scalar_lea.vmem [#allocation3], %s904
          %906 = dma.done %s902, 256
        $region60: #{resblock_forward.1} parent=55 // pred_fallthru
          _
      $region56: #{resblock_forward.1} parent=5 // pred_fallthru
        _
    $region6: #{resblock_forward.1} parent=1 // loop_footer
      %s20 = sadd.s32 1, %s16
    $region7: #{resblock_forward.1} parent=1 // loop_footer_branch
      %15 = sbr.rel target = $region3
    $region8: #{resblock_forward.1} parent=1 // loop_exit
      _
    %907 = vsyncpa [#allocation4], 1
    %s908 = scalar_lea.sflag [#allocation4], 1
    %909 = vsyncpa %s908, 1

</llo_original>
